<compile_context>
chip_gen: v7x
topology: tpu7x:2x2x1
jax: 0.10.0
libtpu: 0.0.40
codegen_flags: <defaults>
</compile_context>

<pallas_src>
import functools

import jax
import jax.numpy as jnp
from jax.experimental import pallas as pl
from jax.experimental.pallas import tpu as pltpu

H1, H2, H3 = 64, 32, 1          # fc1 / fc2 / fc3 output sizes (from the spec)
LANE = 128


def _round_up(n, m):
    return pl.cdiv(n, m) * m


def simple_nn_kernel(x_ref, w1_ref, w2_ref, w3_ref, b_ref, o_ref):
    """One batch tile, batch-on-lanes.

    x_ref : (d_in, TILE_B) bf16     w1_ref: (64, d_in) bf16
    w2_ref: (32, 64)       bf16     w3_ref: (32, 1)    f32
    b_ref : (97, 1)        f32      o_ref : (1, TILE_B) f32
    """
    x = x_ref[...]                                   # (d_in, TILE_B) bf16

    b1 = b_ref[0:H1, :]                              # (64, 1) f32
    b2 = b_ref[H1:H1 + H2, :]                        # (32, 1) f32
    b3 = b_ref[H1 + H2:H1 + H2 + H3, :]              # (1, 1)  f32

    # fc1 + ReLU  (MXU: bf16 operands, f32 accumulate; epilogue in f32)
    h1 = jnp.dot(w1_ref[...], x, preferred_element_type=jnp.float32) + b1
    h1 = jnp.maximum(h1, 0.0)                        # (64, TILE_B) f32

    # fc2 + ReLU
    h2 = jnp.dot(w2_ref[...], h1.astype(jnp.bfloat16),
                 preferred_element_type=jnp.float32) + b2
    h2 = jnp.maximum(h2, 0.0)                        # (32, TILE_B) f32

    # fc3 (32 -> 1): VPU multiply + sublane reduce (keeps the MXU out of a
    # 1-wide output matmul), then sigmoid on the EUP.
    z = jnp.sum(w3_ref[...] * h2, axis=0, keepdims=True) + b3   # (1, TILE_B)
    o_ref[...] = jax.nn.sigmoid(z)


@functools.partial(jax.jit, static_argnames=("tile_b",))
def simple_nn_forward(x, w1, b1, w2, b2, w3, b3, *, tile_b=512):
    """x: (B, input_size) f32. Weights in PyTorch nn.Linear convention
    (w: (out, in), b: (out,)). Returns (B, 1) f32."""
    B, d_in = x.shape

    # Tile the batch on the lane axis; pad B up to a multiple of tile_b.
    tile_b = min(tile_b, _round_up(B, LANE))
    b_pad = _round_up(B, tile_b)
    grid = (b_pad // tile_b,)

    # Batch-on-lanes input: (d_in, B_pad), bf16 (halves HBM traffic for x).
    x_t = jnp.zeros((d_in, b_pad), jnp.bfloat16).at[:, :B].set(
        x.T.astype(jnp.bfloat16))

    # Resident parameters.
    w1b = w1.astype(jnp.bfloat16)                       # (64, d_in)
    w2b = w2.astype(jnp.bfloat16)                       # (32, 64)
    w3c = w3.reshape(H2, H3).astype(jnp.float32)        # (32, 1) column, f32
    biases = jnp.concatenate(
        [b1.reshape(-1, 1), b2.reshape(-1, 1), b3.reshape(-1, 1)],
        axis=0).astype(jnp.float32)                     # (97, 1)

    out = pl.pallas_call(
        simple_nn_kernel,
        out_shape=jax.ShapeDtypeStruct((1, b_pad), jnp.float32),
        grid=grid,
        in_specs=[
            pl.BlockSpec((d_in, tile_b), lambda i: (0, i)),     # x: streams
            pl.BlockSpec(w1b.shape, lambda i: (0, 0)),          # resident
            pl.BlockSpec(w2b.shape, lambda i: (0, 0)),          # resident
            pl.BlockSpec(w3c.shape, lambda i: (0, 0)),          # resident
            pl.BlockSpec(biases.shape, lambda i: (0, 0)),       # resident
        ],
        out_specs=pl.BlockSpec((1, tile_b), lambda i: (0, i)),  # lane-dense
        compiler_params=pltpu.CompilerParams(
            dimension_semantics=("parallel",)),                 # v7x megacore
    )(x_t, w1b, w2b, w3c, biases)

    return out[:, :B].T                                 # (B, 1) f32


def init_params(key, input_size):
    """Deterministic init matching nn.Linear shapes: w (out, in), b (out,)."""
    ks = jax.random.split(key, 6)

    def linear(kw, kb, fan_in, fan_out):
        bound = 1.0 / jnp.sqrt(jnp.float32(fan_in))
        w = jax.random.uniform(kw, (fan_out, fan_in), jnp.float32, -bound, bound)
        b = jax.random.uniform(kb, (fan_out,), jnp.float32, -bound, bound)
        return w, b

    w1, b1 = linear(ks[0], ks[1], input_size, H1)
    w2, b2 = linear(ks[2], ks[3], H1, H2)
    w3, b3 = linear(ks[4], ks[5], H2, H3)
    return w1, b1, w2, b2, w3, b3


if __name__ == "__main__":
    batch = 8
    input_size = 16   # X_train.shape[1] in the original script

    key = jax.random.PRNGKey(0)
    k_x, k_p = jax.random.split(key)

    x = jax.random.normal(k_x, (batch, input_size), dtype=jnp.float32)
    w1, b1, w2, b2, w3, b3 = init_params(k_p, input_size)

    out = simple_nn_forward(x, w1, b1, w2, b2, w3, b3)
    out = jax.block_until_ready(out)
    assert out.shape == (batch, 1)

    # Reference #1: same mixed-precision math (bf16 MXU operands, f32 accum).
    xb = x.T.astype(jnp.bfloat16)
    r1 = jnp.maximum(
        jnp.dot(w1.astype(jnp.bfloat16), xb,
                preferred_element_type=jnp.float32) + b1.reshape(-1, 1), 0.0)
    r2 = jnp.maximum(
        jnp.dot(w2.astype(jnp.bfloat16), r1.astype(jnp.bfloat16),
                preferred_element_type=jnp.float32) + b2.reshape(-1, 1), 0.0)
    rz = jnp.sum(w3.reshape(H2, 1) * r2, axis=0, keepdims=True) + b3.reshape(1, 1)
    ref_bf16 = jax.nn.sigmoid(rz).T
    assert jnp.allclose(out, ref_bf16, atol=2e-3, rtol=2e-3)

    # Reference #2: the original all-f32 module semantics (looser tolerance
    # because the kernel uses bf16 matmul operands).
    ref_f32 = jax.nn.sigmoid(
        jnp.maximum(jnp.maximum(x @ w1.T + b1, 0.0) @ w2.T + b2, 0.0) @ w3.T + b3)
    assert jnp.allclose(out, ref_f32, atol=3e-2, rtol=3e-2)

    print("KERNEL_OK")
</pallas_src>

<mosaic_0001>
module attributes {stable_mosaic.version = 11 : i64} {
  func.func @simple_nn_kernel(%arg0: i32, %arg1: memref<16x128xbf16, #tpu.memory_space<vmem>>, %arg2: memref<64x16xbf16, #tpu.memory_space<vmem>>, %arg3: memref<32x64xbf16, #tpu.memory_space<vmem>>, %arg4: memref<32x1xf32, #tpu.memory_space<vmem>>, %arg5: memref<97x1xf32, #tpu.memory_space<vmem>>, %arg6: memref<1x128xf32, #tpu.memory_space<vmem>>) attributes {dimension_semantics = [#tpu.dimension_semantics<parallel>], iteration_bounds = array<i64: 1>, scalar_prefetch = 0 : i64, scratch_operands = 0 : i64, tpu.core_type = #tpu.core_type<tc>, window_params = [{transform_indices = @transform_0, window_bounds = array<i64: 16, 128>}, {pipeline_mode = #tpu.pipeline_mode<synchronous>, transform_indices = @transform_1, window_bounds = array<i64: 64, 16>}, {pipeline_mode = #tpu.pipeline_mode<synchronous>, transform_indices = @transform_2, window_bounds = array<i64: 32, 64>}, {pipeline_mode = #tpu.pipeline_mode<synchronous>, transform_indices = @transform_3, window_bounds = array<i64: 32, 1>}, {pipeline_mode = #tpu.pipeline_mode<synchronous>, transform_indices = @transform_4, window_bounds = array<i64: 97, 1>}, {transform_indices = @transform_5, window_bounds = array<i64: 1, 128>}]} {
    %c0 = arith.constant 0 : index
    %c0_0 = arith.constant 0 : index
    %0 = vector.load %arg1[%c0, %c0_0] : memref<16x128xbf16, #tpu.memory_space<vmem>>, vector<16x128xbf16>
    %c0_1 = arith.constant 0 : index
    %c0_2 = arith.constant 0 : index
    %1 = vector.load %arg5[%c0_1, %c0_2] : memref<97x1xf32, #tpu.memory_space<vmem>>, vector<64x1xf32>
    %c64 = arith.constant 64 : index
    %c0_3 = arith.constant 0 : index
    %2 = vector.load %arg5[%c64, %c0_3] : memref<97x1xf32, #tpu.memory_space<vmem>>, vector<32x1xf32>
    %c96 = arith.constant 96 : index
    %c0_4 = arith.constant 0 : index
    %3 = vector.load %arg5[%c96, %c0_4] : memref<97x1xf32, #tpu.memory_space<vmem>>, vector<1x1xf32>
    %c0_5 = arith.constant 0 : index
    %c0_6 = arith.constant 0 : index
    %4 = vector.load %arg2[%c0_5, %c0_6] : memref<64x16xbf16, #tpu.memory_space<vmem>>, vector<64x16xbf16>
    %cst = arith.constant dense<0.000000e+00> : vector<64x128xf32>
    %5 = tpu.matmul %4, %0, %cst {dimension_numbers = #tpu.dot_dimension_numbers<[1], [0], [0], [1], [0, 0, 1, 1], [], []>} : vector<64x16xbf16>, vector<16x128xbf16>, vector<64x128xf32> -> vector<64x128xf32>
    %6 = vector.broadcast %1 : vector<64x1xf32> to vector<64x128xf32>
    %7 = arith.addf %5, %6 : vector<64x128xf32>
    %cst_7 = arith.constant 0.000000e+00 : f32
    %8 = vector.broadcast %cst_7 : f32 to vector<64x128xf32>
    %9 = arith.maximumf %7, %8 : vector<64x128xf32>
    %c0_8 = arith.constant 0 : index
    %c0_9 = arith.constant 0 : index
    %10 = vector.load %arg3[%c0_8, %c0_9] : memref<32x64xbf16, #tpu.memory_space<vmem>>, vector<32x64xbf16>
    %11 = arith.truncf %9 : vector<64x128xf32> to vector<64x128xbf16>
    %cst_10 = arith.constant dense<0.000000e+00> : vector<32x128xf32>
    %12 = tpu.matmul %10, %11, %cst_10 {dimension_numbers = #tpu.dot_dimension_numbers<[1], [0], [0], [1], [0, 0, 1, 1], [], []>} : vector<32x64xbf16>, vector<64x128xbf16>, vector<32x128xf32> -> vector<32x128xf32>
    %13 = vector.broadcast %2 : vector<32x1xf32> to vector<32x128xf32>
    %14 = arith.addf %12, %13 : vector<32x128xf32>
    %cst_11 = arith.constant 0.000000e+00 : f32
    %15 = vector.broadcast %cst_11 : f32 to vector<32x128xf32>
    %16 = arith.maximumf %14, %15 : vector<32x128xf32>
    %c0_12 = arith.constant 0 : index
    %c0_13 = arith.constant 0 : index
    %17 = vector.load %arg4[%c0_12, %c0_13] : memref<32x1xf32, #tpu.memory_space<vmem>>, vector<32x1xf32>
    %18 = vector.broadcast %17 : vector<32x1xf32> to vector<32x128xf32>
    %19 = arith.mulf %18, %16 : vector<32x128xf32>
    %cst_14 = arith.constant dense<0.000000e+00> : vector<128xf32>
    %20 = vector.multi_reduction <add>, %19, %cst_14 [0] : vector<32x128xf32> to vector<128xf32>
    %21 = vector.shape_cast %20 : vector<128xf32> to vector<1x128xf32>
    %22 = vector.broadcast %3 : vector<1x1xf32> to vector<1x128xf32>
    %23 = arith.addf %21, %22 : vector<1x128xf32>
    %24 = arith.negf %23 : vector<1x128xf32>
    %25 = math.exp %24 : vector<1x128xf32>
    %cst_15 = arith.constant 1.000000e+00 : f32
    %26 = vector.broadcast %cst_15 : f32 to vector<1x128xf32>
    %27 = arith.addf %26, %25 : vector<1x128xf32>
    %28 = arith.divf %26, %27 : vector<1x128xf32>
    %c0_16 = arith.constant 0 : index
    %c0_17 = arith.constant 0 : index
    %29 = vector.load %arg6[%c0_16, %c0_17] : memref<1x128xf32, #tpu.memory_space<vmem>>, vector<1x128xf32>
    tpu.vector_store %arg6[%c0_16, %c0_17], %28 {strides = array<i32>} : memref<1x128xf32, #tpu.memory_space<vmem>>, vector<1x128xf32>,
    return
  }
  func.func @transform_0(%arg0: i32) -> (i32, i32) {
    %c0_i32 = arith.constant 0 : i32
    %c0_i32_0 = arith.constant 0 : i32
    return %c0_i32, %arg0 : i32, i32
  }
  func.func @transform_1(%arg0: i32) -> (i32, i32) {
    %c0_i32 = arith.constant 0 : i32
    %c0_i32_0 = arith.constant 0 : i32
    %c0_i32_1 = arith.constant 0 : i32
    return %c0_i32, %c0_i32_0 : i32, i32
  }
  func.func @transform_2(%arg0: i32) -> (i32, i32) {
    %c0_i32 = arith.constant 0 : i32
    %c0_i32_0 = arith.constant 0 : i32
    %c0_i32_1 = arith.constant 0 : i32
    return %c0_i32, %c0_i32_0 : i32, i32
  }
  func.func @transform_3(%arg0: i32) -> (i32, i32) {
    %c0_i32 = arith.constant 0 : i32
    %c0_i32_0 = arith.constant 0 : i32
    %c0_i32_1 = arith.constant 0 : i32
    return %c0_i32, %c0_i32_0 : i32, i32
  }
  func.func @transform_4(%arg0: i32) -> (i32, i32) {
    %c0_i32 = arith.constant 0 : i32
    %c0_i32_0 = arith.constant 0 : i32
    %c0_i32_1 = arith.constant 0 : i32
    return %c0_i32, %c0_i32_0 : i32, i32
  }
  func.func @transform_5(%arg0: i32) -> (i32, i32) {
    %c0_i32 = arith.constant 0 : i32
    %c0_i32_0 = arith.constant 0 : i32
    return %c0_i32, %arg0 : i32, i32
  }
}

</mosaic_0001>

<llo_original>
// kernel: simple_nn_forward.1
$region0: #{simple_nn_forward.1}
  #allocation0 [shape = 'u32[]', space=smem, size = 0x4, offset = 0x4, fixed_abs, tag = 'smem constant byte address 0x4 - core index']
  #allocation1 [shape = 'u32[144,128]{1,0:T(1,128)}', space=vmem, size = 0x12000, scoped, tag = 'internal scratch']
  %s0 = inlined_call_operand.vmem [shape: bf16[16,128], index: 0, kind: input, shape index: {}]
  %s1 = inlined_call_operand.vmem [shape: bf16[64,16], index: 1, kind: input, shape index: {}]
  %s2 = inlined_call_operand.vmem [shape: bf16[32,64], index: 2, kind: input, shape index: {}]
  %s3 = inlined_call_operand.vmem [shape: f32[32,1], index: 3, kind: input, shape index: {}]
  %s4 = inlined_call_operand.vmem [shape: f32[97,1], index: 4, kind: input, shape index: {}]
  %s5 = inlined_call_operand.vmem [shape: f32[1,128], index: 5, kind: output, shape index: {}]
  %s6 = sld [smem:[#allocation0]]
  $region30: #{simple_nn_forward.1} parent=0
    _
  %s8 = ssub.s32 1, %s6
  %s9 = scalar_select 0, %s8, %s6
  // Predicated region
  $region2: #{simple_nn_forward.1} parent=0 // pred_check
    _
  $region3: #{simple_nn_forward.1} parent=0 // pred_check_branch
    %11 = sbr.rel (0) target = $region5
  $region4: #{simple_nn_forward.1} parent=0 // pred_region
    _
  $region5: #{simple_nn_forward.1} parent=0 // pred_fallthru
    _
  // Predicated region
  $region6: #{simple_nn_forward.1} parent=0 // pred_check
    _
  $region7: #{simple_nn_forward.1} parent=0 // pred_check_branch
    %13 = sbr.rel (0) target = $region9
  $region8: #{simple_nn_forward.1} parent=0 // pred_region
    _
  $region9: #{simple_nn_forward.1} parent=0 // pred_fallthru
    _
  // Predicated region
  $region10: #{simple_nn_forward.1} parent=0 // pred_check
    _
  $region11: #{simple_nn_forward.1} parent=0 // pred_check_branch
    %15 = sbr.rel (0) target = $region13
  $region12: #{simple_nn_forward.1} parent=0 // pred_region
    _
  $region13: #{simple_nn_forward.1} parent=0 // pred_fallthru
    _
  // Predicated region
  $region14: #{simple_nn_forward.1} parent=0 // pred_check
    _
  $region15: #{simple_nn_forward.1} parent=0 // pred_check_branch
    %17 = sbr.rel (0) target = $region17
  $region16: #{simple_nn_forward.1} parent=0 // pred_region
    _
  $region17: #{simple_nn_forward.1} parent=0 // pred_fallthru
    _
  // Predicated region
  $region18: #{simple_nn_forward.1} parent=0 // pred_check
    _
  $region19: #{simple_nn_forward.1} parent=0 // pred_check_branch
    %19 = sbr.rel (0) target = $region21
  $region20: #{simple_nn_forward.1} parent=0 // pred_region
    _
  $region21: #{simple_nn_forward.1} parent=0 // pred_fallthru
    _
  %v21 = vld [vmem:[%s0] sm:$0xf]
  %v22 = vld [vmem:[%s0 + $0x4] sm:$0xf]
  %v23 = vld [vmem:[%s4] sm:$0xff]
  %v24 = vld [vmem:[%s4 + $0x8] sm:$0xff]
  %v25 = vld [vmem:[%s4 + $0x10] sm:$0xff]
  %v26 = vld [vmem:[%s4 + $0x18] sm:$0xff]
  %v27 = vld [vmem:[%s4 + $0x20] sm:$0xff]
  %v28 = vld [vmem:[%s4 + $0x28] sm:$0xff]
  %v29 = vld [vmem:[%s4 + $0x30] sm:$0xff]
  %v30 = vld [vmem:[%s4 + $0x38] sm:$0xff]
  %v31 = vld [vmem:[%s4 + $0x40] sm:$0xff]
  %v32 = vld [vmem:[%s4 + $0x48] sm:$0xff]
  %v33 = vld [vmem:[%s4 + $0x50] sm:$0xff]
  %v34 = vld [vmem:[%s4 + $0x58] sm:$0xff]
  %v35 = vld [vmem:[%s4 + $0x60] sm:$0x1]
  %v36 = vld [vmem:[%s1] sm:$0xf]
  %v37 = vld [vmem:[%s1 + $0x4] sm:$0xf]
  %v38 = vld [vmem:[%s1 + $0x8] sm:$0xf]
  %v39 = vld [vmem:[%s1 + $0xc] sm:$0xf]
  %v40 = vld [vmem:[%s1 + $0x10] sm:$0xf]
  %v41 = vld [vmem:[%s1 + $0x14] sm:$0xf]
  %v42 = vld [vmem:[%s1 + $0x18] sm:$0xf]
  %v43 = vld [vmem:[%s1 + $0x1c] sm:$0xf]
  %45 = vset.pattern.permute.xlu0 0
  %46 = vperm.xlu0 %45, %v23
  %v47 = vpop.permute.xlu0 %46
  %50 = vset.pattern.permute.xlu0 0
  %51 = vperm.xlu0 %50, %v24
  %v52 = vpop.permute.xlu0 %51
  %55 = vset.pattern.permute.xlu0 0
  %56 = vperm.xlu0 %55, %v25
  %v57 = vpop.permute.xlu0 %56
  %60 = vset.pattern.permute.xlu0 0
  %61 = vperm.xlu0 %60, %v26
  %v62 = vpop.permute.xlu0 %61
  %65 = vset.pattern.permute.xlu0 0
  %66 = vperm.xlu0 %65, %v27
  %v67 = vpop.permute.xlu0 %66
  %70 = vset.pattern.permute.xlu0 0
  %71 = vperm.xlu0 %70, %v28
  %v72 = vpop.permute.xlu0 %71
  %75 = vset.pattern.permute.xlu0 0
  %76 = vperm.xlu0 %75, %v29
  %v77 = vpop.permute.xlu0 %76
  %80 = vset.pattern.permute.xlu0 0
  %81 = vperm.xlu0 %80, %v30
  %v82 = vpop.permute.xlu0 %81
  %v92 = vunpack.c.l.b16 %v36
  %v93 = vunpack.c.l.b16 %v37
  %v94 = vunpack.c.l.b16 %v38
  %v95 = vunpack.c.l.b16 %v39
  %v96 = vunpack.c.l.b16 %v40
  %v97 = vunpack.c.l.b16 %v41
  %v98 = vunpack.c.l.b16 %v42
  %v99 = vunpack.c.l.b16 %v43
  %v100 = vpack.c.b16 %v93, %v92
  %v101 = vpack.c.b16 %v95, %v94
  %v102 = vpack.c.b16 %v97, %v96
  %v103 = vpack.c.b16 %v99, %v98
  %v106 = vunpack.c.l.b16 %v21
  %v107 = vunpack.c.l.b16 %v22
  %v108 = vpack.c.b16 %v107, %v106
  %vm110 = vcmask 130048
  %v112 = vsel %vm110, %v100, 0
  %v115 = vsel %vm110, %v101, 0
  %v118 = vsel %vm110, %v102, 0
  %v121 = vsel %vm110, %v103, 0
  %123 = vmatprep.subr.bf16.mxu0 0
  %124 = vmatpush1.bf16.msra.mxu0 %v108
  %125 = vmatprep.subr.bf16.mxu0 0
  %126 = vmatpush1.bf16.msra.mxu0 0
  %127 = vmatprep.subr.bf16.mxu0 0
  %128 = vmatpush1.bf16.msra.mxu0 0
  %129 = vmatprep.subr.bf16.mxu0 0
  %130 = vmatpush1.bf16.msra.mxu0 0
  %131 = vmatprep.subr.bf16.mxu0 0
  %132 = vmatpush1.bf16.msra.mxu0 0
  %133 = vmatprep.subr.bf16.mxu0 0
  %134 = vmatpush1.bf16.msra.mxu0 0
  %135 = vmatprep.subr.bf16.mxu0 0
  %136 = vmatpush1.bf16.msra.mxu0 0
  %137 = vmatprep.subr.bf16.mxu0 0
  %138 = vmatpush1.bf16.msra.mxu0 0
  %139 = vmatprep.subr.bf16.mxu0 0
  %140 = vmatpush1.bf16.msra.mxu0 0
  %141 = vmatprep.subr.bf16.mxu0 0
  %142 = vmatpush1.bf16.msra.mxu0 0
  %143 = vmatprep.subr.bf16.mxu0 0
  %144 = vmatpush1.bf16.msra.mxu0 0
  %145 = vmatprep.subr.bf16.mxu0 0
  %146 = vmatpush1.bf16.msra.mxu0 0
  %147 = vmatprep.subr.bf16.mxu0 0
  %148 = vmatpush1.bf16.msra.mxu0 0
  %149 = vmatprep.subr.bf16.mxu0 0
  %150 = vmatpush1.bf16.msra.mxu0 0
  %151 = vmatprep.subr.bf16.mxu0 0
  %152 = vmatpush1.bf16.msra.mxu0 0
  %153 = vmatprep.subr.bf16.mxu0 0
  %154 = vmatpush1.bf16.msra.mxu0 0
  %155 = vmatprep.mubr.bf16.mxu0 0
  %156 = vmatmul.mubr.bf16.gmra.mrb[0].mxu0 %v112
  %v157 = vpop.f32.mrb[0].mxu0
  %v158 = vadd.f32 %v47, %v157
  %v159 = vpop.f32.mrb[0].mxu0
  %v160 = vpop.f32.mrb[0].mxu0
  %v161 = vadd.f32 %v52, %v160
  %v162 = vpop.f32.mrb[0].mxu0
  %163 = vmatprep.mubr.bf16.mxu0 0
  %164 = vmatmul.mubr.bf16.gmra.mrb[0].mxu0 %v115
  %v165 = vpop.f32.mrb[0].mxu0
  %v166 = vadd.f32 %v57, %v165
  %v167 = vpop.f32.mrb[0].mxu0
  %v168 = vpop.f32.mrb[0].mxu0
  %v169 = vadd.f32 %v62, %v168
  %v170 = vpop.f32.mrb[0].mxu0
  %171 = vmatprep.mubr.bf16.mxu0 0
  %172 = vmatmul.mubr.bf16.gmra.mrb[0].mxu0 %v118
  %v173 = vpop.f32.mrb[0].mxu0
  %v174 = vadd.f32 %v67, %v173
  %v175 = vpop.f32.mrb[0].mxu0
  %v176 = vpop.f32.mrb[0].mxu0
  %v177 = vadd.f32 %v72, %v176
  %v178 = vpop.f32.mrb[0].mxu0
  %179 = vmatprep.mubr.bf16.mxu0 0
  %180 = vmatmul.mubr.bf16.gmra.mrb[0].mxu0 %v121
  %v181 = vpop.f32.mrb[0].mxu0
  %v182 = vadd.f32 %v77, %v181
  %v183 = vpop.f32.mrb[0].mxu0
  %v184 = vpop.f32.mrb[0].mxu0
  %v185 = vadd.f32 %v82, %v184
  %v186 = vpop.f32.mrb[0].mxu0
  %187 = vdwg.mxu0
  %v188 = vmax.f32 %v158, 0.0
  %v189 = vmax.f32 %v161, 0.0
  %v190 = vmax.f32 %v166, 0.0
  %v191 = vmax.f32 %v169, 0.0
  %v192 = vmax.f32 %v174, 0.0
  %v193 = vmax.f32 %v177, 0.0
  %v194 = vmax.f32 %v182, 0.0
  %v195 = vmax.f32 %v185, 0.0
  %v196 = vld [vmem:[%s2] sm:$0xf]
  %v197 = vld [vmem:[%s2 + $0x4] sm:$0xf]
  %v198 = vld [vmem:[%s2 + $0x8] sm:$0xf]
  %v199 = vld [vmem:[%s2 + $0xc] sm:$0xf]
  %v200 = vpack.c.bf16 %v189, %v188
  %v201 = vpack.c.bf16 %v191, %v190
  %v202 = vpack.c.bf16 %v193, %v192
  %v203 = vpack.c.bf16 %v195, %v194
  %205 = vset.pattern.permute.xlu0 0
  %206 = vperm.xlu0 %205, %v31
  %v207 = vpop.permute.xlu0 %206
  %210 = vset.pattern.permute.xlu0 0
  %211 = vperm.xlu0 %210, %v32
  %v212 = vpop.permute.xlu0 %211
  %215 = vset.pattern.permute.xlu0 0
  %216 = vperm.xlu0 %215, %v33
  %v217 = vpop.permute.xlu0 %216
  %220 = vset.pattern.permute.xlu0 0
  %221 = vperm.xlu0 %220, %v34
  %v222 = vpop.permute.xlu0 %221
  %v228 = vunpack.c.l.b16 %v196
  %v229 = vunpack.c.l.b16 %v197
  %v230 = vunpack.c.l.b16 %v198
  %v231 = vunpack.c.l.b16 %v199
  %v232 = vpack.c.b16 %v229, %v228
  %v233 = vpack.c.b16 %v231, %v230
  %vm234 = vcmask 523264
  %v236 = vsel %vm234, %v232, 0
  %v239 = vsel %vm234, %v233, 0
  %241 = vmatprep.subr.bf16.mxu0 0
  %242 = vmatpush1.bf16.msra.mxu0 %v200
  %243 = vmatprep.subr.bf16.mxu0 0
  %244 = vmatpush1.bf16.msra.mxu0 %v201
  %245 = vmatprep.subr.bf16.mxu0 0
  %246 = vmatpush1.bf16.msra.mxu0 %v202
  %247 = vmatprep.subr.bf16.mxu0 0
  %248 = vmatpush1.bf16.msra.mxu0 %v203
  %249 = vmatprep.subr.bf16.mxu0 0
  %250 = vmatpush1.bf16.msra.mxu0 0
  %251 = vmatprep.subr.bf16.mxu0 0
  %252 = vmatpush1.bf16.msra.mxu0 0
  %253 = vmatprep.subr.bf16.mxu0 0
  %254 = vmatpush1.bf16.msra.mxu0 0
  %255 = vmatprep.subr.bf16.mxu0 0
  %256 = vmatpush1.bf16.msra.mxu0 0
  %257 = vmatprep.subr.bf16.mxu0 0
  %258 = vmatpush1.bf16.msra.mxu0 0
  %259 = vmatprep.subr.bf16.mxu0 0
  %260 = vmatpush1.bf16.msra.mxu0 0
  %261 = vmatprep.subr.bf16.mxu0 0
  %262 = vmatpush1.bf16.msra.mxu0 0
  %263 = vmatprep.subr.bf16.mxu0 0
  %264 = vmatpush1.bf16.msra.mxu0 0
  %265 = vmatprep.subr.bf16.mxu0 0
  %266 = vmatpush1.bf16.msra.mxu0 0
  %267 = vmatprep.subr.bf16.mxu0 0
  %268 = vmatpush1.bf16.msra.mxu0 0
  %269 = vmatprep.subr.bf16.mxu0 0
  %270 = vmatpush1.bf16.msra.mxu0 0
  %271 = vmatprep.subr.bf16.mxu0 0
  %272 = vmatpush1.bf16.msra.mxu0 0
  %273 = vmatprep.mubr.bf16.mxu0 0
  %274 = vmatmul.mubr.bf16.gmra.mrb[0].mxu0 %v236
  %v275 = vpop.f32.mrb[0].mxu0
  %v276 = vadd.f32 %v207, %v275
  %v277 = vpop.f32.mrb[0].mxu0
  %v278 = vpop.f32.mrb[0].mxu0
  %v279 = vadd.f32 %v212, %v278
  %v280 = vpop.f32.mrb[0].mxu0
  %281 = vmatprep.mubr.bf16.mxu0 0
  %282 = vmatmul.mubr.bf16.gmra.mrb[0].mxu0 %v239
  %v283 = vpop.f32.mrb[0].mxu0
  %v284 = vadd.f32 %v217, %v283
  %v285 = vpop.f32.mrb[0].mxu0
  %v286 = vpop.f32.mrb[0].mxu0
  %v287 = vadd.f32 %v222, %v286
  %v288 = vpop.f32.mrb[0].mxu0
  %289 = vdwg.mxu0
  %v290 = vmax.f32 %v276, 0.0
  %v291 = vmax.f32 %v279, 0.0
  %v292 = vmax.f32 %v284, 0.0
  %v293 = vmax.f32 %v287, 0.0
  %v294 = vld [vmem:[%s3] sm:$0xff]
  %v295 = vld [vmem:[%s3 + $0x8] sm:$0xff]
  %v296 = vld [vmem:[%s3 + $0x10] sm:$0xff]
  %v297 = vld [vmem:[%s3 + $0x18] sm:$0xff]
  %299 = vset.pattern.permute.xlu0 0
  %300 = vperm.xlu0 %299, %v294
  %v301 = vpop.permute.xlu0 %300
  %304 = vset.pattern.permute.xlu0 0
  %305 = vperm.xlu0 %304, %v295
  %v306 = vpop.permute.xlu0 %305
  %309 = vset.pattern.permute.xlu0 0
  %310 = vperm.xlu0 %309, %v296
  %v311 = vpop.permute.xlu0 %310
  %314 = vset.pattern.permute.xlu0 0
  %315 = vperm.xlu0 %314, %v297
  %v316 = vpop.permute.xlu0 %315
  %v318 = vmul.f32 %v301, %v290
  %v319 = vmul.f32 %v306, %v291
  %v320 = vmul.f32 %v311, %v292
  %v321 = vmul.f32 %v316, %v293
  %v322 = vadd.f32 %v318, %v319
  %v323 = vadd.f32 %v322, %v320
  %v324 = vadd.f32 %v323, %v321
  %v325 = vrot.slane %v324, 4
  %v326 = vadd.f32 %v324, %v325
  %v327 = vrot.slane %v326, 2
  %v328 = vadd.f32 %v326, %v327
  %v329 = vrot.slane %v328, 1
  %v330 = vadd.f32 %v328, %v329
  %332 = vset.pattern.permute.xlu0 0
  %333 = vperm.xlu0 %332, %v35
  %v334 = vpop.permute.xlu0 %333
  %v336 = vadd.f32 %v330, %v334
  %v337 = vxor.u32 %v336, 2147483648
  %v338 = vmul.f32 %v337, 1.442695
  %v339 = vpow.pop %v338
  %v340 = vadd.f32 %v339, 1.0
  %v341 = vrcp.pop %v340
  %v342 = vmul.f32 1.0, %v341
  %343 = vst [vmem:[%s5] sm:$0x1] %v342
  // Predicated region
  $region22: #{simple_nn_forward.1} parent=0 // pred_check
    _
  $region23: #{simple_nn_forward.1} parent=0 // pred_check_branch
    %345 = sbr.rel (0) target = $region25
  $region24: #{simple_nn_forward.1} parent=0 // pred_region
    _
  $region25: #{simple_nn_forward.1} parent=0 // pred_fallthru
    _
  // Predicated region
  $region26: #{simple_nn_forward.1} parent=0 // pred_check
    _
  $region27: #{simple_nn_forward.1} parent=0 // pred_check_branch
    %347 = sbr.rel (0) target = $region29
  $region28: #{simple_nn_forward.1} parent=0 // pred_region
    _
  $region29: #{simple_nn_forward.1} parent=0 // pred_fallthru
    _

</llo_original>
